<compile_context>
chip_gen: v5e
topology: v5e:2x2
jax: 0.10.0
libtpu: 0.0.40
codegen_flags: <defaults>
</compile_context>

<pallas_src>
import functools

import jax
import jax.numpy as jnp
from jax.experimental import pallas as pl
from jax.experimental.pallas import tpu as pltpu


def _denoiser_kernel(x_ref, w1_ref, b1_ref, w2_ref, b2_ref, o_ref):
    # x_ref : (TB, code_dim)    batch tile (native dtype)
    # w1_ref: (code_dim, hidden), b1_ref: (1, hidden)
    # w2_ref: (hidden, code_dim), b2_ref: (1, code_dim)
    x = x_ref[...]
    if x.dtype != w1_ref.dtype:
        # Uniform-dtype operands keep the MXU on its fast path (e.g. pure bf16);
        # accumulation below is still f32 via preferred_element_type.
        x = x.astype(w1_ref.dtype)

    # Linear 1 + ReLU : MXU matmul with f32 accumulation, bias/ReLU on the VPU.
    h = jnp.dot(x, w1_ref[...], preferred_element_type=jnp.float32)
    h = jnp.maximum(h + b1_ref[...], 0.0)

    # Linear 2 + Sigmoid : cast the activation to the weight dtype (no-op for f32).
    h = h.astype(w2_ref.dtype)
    y = jnp.dot(h, w2_ref[...], preferred_element_type=jnp.float32)
    y = jax.nn.sigmoid(y + b2_ref[...])          # exp runs on the (otherwise idle) EUP

    o_ref[...] = y.astype(o_ref.dtype)


def _sublane_multiple(dtype):
    # min second-to-last-dim tile: 8 for 4-byte, 16 for 2-byte, 32 for 1-byte dtypes
    return max(8, 32 // jnp.dtype(dtype).itemsize)


def _round_up(n, m):
    return ((n + m - 1) // m) * m


def _vmem_budget_bytes():
    """Per-generation VMEM budget, leaving headroom for Mosaic internal scratch."""
    cap = 64 * 1024 * 1024  # conservative default = v7x per-TensorCore VMEM
    try:
        cap = int(getattr(pltpu.get_tpu_info(), "vmem_capacity_bytes", cap))
    except Exception:
        pass
    # ~13/16 of physical capacity: ~52 MiB on v7x, ~104 MiB on v5e/v6e.
    return (cap * 13) // 16


@functools.partial(jax.jit, static_argnames=("block_b",))
def denoiser_forward(x, w1, b1, w2, b2, *, block_b=1024):
    """x: (B, code_dim) -> (B, code_dim), matching Denoiser.forward.

    w1: (code_dim, hidden), b1: (hidden,), w2: (hidden, code_dim), b2: (code_dim,)
    """
    B, code_dim = x.shape
    hidden = w1.shape[1]

    x_item = jnp.dtype(x.dtype).itemsize
    w_item = jnp.dtype(w1.dtype).itemsize
    sub = _sublane_multiple(x.dtype)
    budget = _vmem_budget_bytes()

    # Resident (grid-invariant) weights + biases.  The main pipeline still allocates
    # double buffers for them, so budget 2x.
    w_resident = 2 * ((code_dim * hidden + hidden * code_dim) * w_item
                      + (hidden + code_dim) * w_item)

    def est(blk):
        act = 2 * blk * code_dim * 2 * x_item          # double-buffered x and out tiles
        interm = blk * (hidden + code_dim) * 4         # f32 matmul results in VMEM
        return w_resident + act + interm

    if est(sub) > budget:
        # TODO(synk): K-tiled reduction path for weights that don't fit VMEM.
        raise ValueError(
            f"Denoiser weights ({w_resident} bytes resident, double-buffered) exceed "
            f"the VMEM budget ({budget} bytes); K-tiling not implemented.")

    # Largest batch tile that fits the budget, starting from the requested block_b.
    blk = max(sub, min(_round_up(int(block_b), sub), _round_up(B, sub)))
    while blk > sub and est(blk) > budget:
        blk = max(sub, _round_up(blk // 2, sub))

    # Guarantee >= 2 grid steps when the batch allows it, so the "parallel" axis
    # splits across both TensorCores on v7x (negligible cost on 1-TC generations).
    if pl.cdiv(B, blk) == 1 and B > sub:
        blk = max(sub, _round_up(pl.cdiv(B, 2), sub))

    n_blocks = pl.cdiv(B, blk)

    # Bias rows (1, dim) so the kernel broadcasts along the batch tile.
    b1r = b1.reshape(1, hidden)
    b2r = b2.reshape(1, code_dim)

    cost = pl.CostEstimate(
        flops=4 * B * code_dim * hidden,               # two matmuls, 2 flops/MAC
        transcendentals=B * code_dim,                  # one exp per sigmoid output
        bytes_accessed=(2 * B * code_dim * x_item
                        + (2 * code_dim * hidden + hidden + code_dim) * w_item),
    )

    # No wrapper-side padding: out_shape is the true (B, code_dim); Pallas pads the
    # ragged final tile on read and discards out-of-bounds rows on write.
    return pl.pallas_call(
        _denoiser_kernel,
        out_shape=jax.ShapeDtypeStruct((B, code_dim), x.dtype),
        grid_spec=pltpu.PrefetchScalarGridSpec(
            num_scalar_prefetch=0,
            grid=(n_blocks,),
            in_specs=[
                # batch tile of the activations
                pl.BlockSpec((blk, code_dim), lambda i: (i, 0)),
                # full weights / biases, resident across the whole grid
                pl.BlockSpec((code_dim, hidden), lambda i: (0, 0)),
                pl.BlockSpec((1, hidden), lambda i: (0, 0)),
                pl.BlockSpec((hidden, code_dim), lambda i: (0, 0)),
                pl.BlockSpec((1, code_dim), lambda i: (0, 0)),
            ],
            out_specs=pl.BlockSpec((blk, code_dim), lambda i: (i, 0)),
        ),
        compiler_params=pltpu.CompilerParams(
            dimension_semantics=("parallel",),
            vmem_limit_bytes=int(budget),
        ),
        cost_estimate=cost,
    )(x, w1, b1r, w2, b2r)


def _reference_forward(x, w1, b1, w2, b2):
    h = jnp.maximum(x @ w1 + b1[None, :], 0.0)
    return jax.nn.sigmoid(h @ w2 + b2[None, :])


if __name__ == "__main__":
    # Small shapes consistent with the module (Linear(code_dim, hidden) MLP).
    batch = 20          # deliberately NOT a multiple of the tile -> ragged last block
    code_dim = 256
    hidden = 128

    key = jax.random.PRNGKey(0)
    kx, kw1, kb1, kw2, kb2 = jax.random.split(key, 5)

    x = jax.random.normal(kx, (batch, code_dim), dtype=jnp.float32)

    # Deterministic synthetic parameters (kaiming-ish scale, like nn.Linear init).
    w1 = jax.random.uniform(kw1, (code_dim, hidden), jnp.float32,
                            -1.0, 1.0) / jnp.sqrt(code_dim)
    b1 = jax.random.uniform(kb1, (hidden,), jnp.float32,
                            -1.0, 1.0) / jnp.sqrt(code_dim)
    w2 = jax.random.uniform(kw2, (hidden, code_dim), jnp.float32,
                            -1.0, 1.0) / jnp.sqrt(hidden)
    b2 = jax.random.uniform(kb2, (code_dim,), jnp.float32,
                            -1.0, 1.0) / jnp.sqrt(hidden)

    ref = _reference_forward(x, w1, b1, w2, b2)

    # Default path: batch split into >=2 tiles (v7x megacore) + ragged last tile.
    out = jax.block_until_ready(denoiser_forward(x, w1, b1, w2, b2))
    assert out.shape == (batch, code_dim)
    assert jnp.allclose(out, ref, atol=1e-5, rtol=1e-5), "mismatch vs reference (default tile)"

    # Small explicit tile: exercises the multi-step grid with a ragged final block.
    out_small = jax.block_until_ready(denoiser_forward(x, w1, b1, w2, b2, block_b=8))
    assert jnp.allclose(out_small, ref, atol=1e-5, rtol=1e-5), "mismatch vs reference (block_b=8)"

    # bf16 weights with f32 activations: exercises the uniform-dtype MXU cast path.
    # (Internal bf16 downcasts of x and the hidden activation -> looser tolerance.)
    out_bf16 = jax.block_until_ready(
        denoiser_forward(x, w1.astype(jnp.bfloat16), b1.astype(jnp.bfloat16),
                         w2.astype(jnp.bfloat16), b2.astype(jnp.bfloat16)))
    assert jnp.allclose(out_bf16, ref, atol=3e-2, rtol=0), "mismatch vs reference (bf16 weights)"

    print("KERNEL_OK")
</pallas_src>

<mosaic_0001>
module attributes {stable_mosaic.version = 11 : i64} {
  func.func @_denoiser_kernel(%arg0: i32, %arg1: memref<16x256xf32, #tpu.memory_space<vmem>>, %arg2: memref<256x128xf32, #tpu.memory_space<vmem>>, %arg3: memref<1x128xf32, #tpu.memory_space<vmem>>, %arg4: memref<128x256xf32, #tpu.memory_space<vmem>>, %arg5: memref<1x256xf32, #tpu.memory_space<vmem>>, %arg6: memref<16x256xf32, #tpu.memory_space<vmem>>) attributes {dimension_semantics = [#tpu.dimension_semantics<parallel>], iteration_bounds = array<i64: 2>, scalar_prefetch = 0 : i64, scratch_operands = 0 : i64, tpu.core_type = #tpu.core_type<tc>, window_params = [{transform_indices = @transform_0, window_bounds = array<i64: 16, 256>}, {pipeline_mode = #tpu.pipeline_mode<synchronous>, transform_indices = @transform_1, window_bounds = array<i64: 256, 128>}, {pipeline_mode = #tpu.pipeline_mode<synchronous>, transform_indices = @transform_2, window_bounds = array<i64: 1, 128>}, {pipeline_mode = #tpu.pipeline_mode<synchronous>, transform_indices = @transform_3, window_bounds = array<i64: 128, 256>}, {pipeline_mode = #tpu.pipeline_mode<synchronous>, transform_indices = @transform_4, window_bounds = array<i64: 1, 256>}, {transform_indices = @transform_5, window_bounds = array<i64: 16, 256>}]} {
    %c0 = arith.constant 0 : index
    %c0_0 = arith.constant 0 : index
    %0 = vector.load %arg1[%c0, %c0_0] : memref<16x256xf32, #tpu.memory_space<vmem>>, vector<16x256xf32>
    %c0_1 = arith.constant 0 : index
    %c0_2 = arith.constant 0 : index
    %1 = vector.load %arg2[%c0_1, %c0_2] : memref<256x128xf32, #tpu.memory_space<vmem>>, vector<256x128xf32>
    %cst = arith.constant dense<0.000000e+00> : vector<16x128xf32>
    %2 = tpu.matmul %0, %1, %cst {dimension_numbers = #tpu.dot_dimension_numbers<[1], [0], [0], [1], [0, 0, 1, 1], [], []>} : vector<16x256xf32>, vector<256x128xf32>, vector<16x128xf32> -> vector<16x128xf32>
    %c0_3 = arith.constant 0 : index
    %c0_4 = arith.constant 0 : index
    %3 = vector.load %arg3[%c0_3, %c0_4] : memref<1x128xf32, #tpu.memory_space<vmem>>, vector<1x128xf32>
    %4 = vector.broadcast %3 : vector<1x128xf32> to vector<16x128xf32>
    %5 = arith.addf %2, %4 : vector<16x128xf32>
    %cst_5 = arith.constant 0.000000e+00 : f32
    %6 = vector.broadcast %cst_5 : f32 to vector<16x128xf32>
    %7 = arith.maximumf %5, %6 : vector<16x128xf32>
    %c0_6 = arith.constant 0 : index
    %c0_7 = arith.constant 0 : index
    %8 = vector.load %arg4[%c0_6, %c0_7] : memref<128x256xf32, #tpu.memory_space<vmem>>, vector<128x256xf32>
    %cst_8 = arith.constant dense<0.000000e+00> : vector<16x256xf32>
    %9 = tpu.matmul %7, %8, %cst_8 {dimension_numbers = #tpu.dot_dimension_numbers<[1], [0], [0], [1], [0, 0, 1, 1], [], []>} : vector<16x128xf32>, vector<128x256xf32>, vector<16x256xf32> -> vector<16x256xf32>
    %c0_9 = arith.constant 0 : index
    %c0_10 = arith.constant 0 : index
    %10 = vector.load %arg5[%c0_9, %c0_10] : memref<1x256xf32, #tpu.memory_space<vmem>>, vector<1x256xf32>
    %11 = vector.broadcast %10 : vector<1x256xf32> to vector<16x256xf32>
    %12 = arith.addf %9, %11 : vector<16x256xf32>
    %13 = arith.negf %12 : vector<16x256xf32>
    %14 = math.exp %13 : vector<16x256xf32>
    %cst_11 = arith.constant 1.000000e+00 : f32
    %15 = vector.broadcast %cst_11 : f32 to vector<16x256xf32>
    %16 = arith.addf %15, %14 : vector<16x256xf32>
    %17 = arith.divf %15, %16 : vector<16x256xf32>
    %c0_12 = arith.constant 0 : index
    %c0_13 = arith.constant 0 : index
    %18 = vector.load %arg6[%c0_12, %c0_13] : memref<16x256xf32, #tpu.memory_space<vmem>>, vector<16x256xf32>
    tpu.vector_store %arg6[%c0_12, %c0_13], %17 {strides = array<i32>} : memref<16x256xf32, #tpu.memory_space<vmem>>, vector<16x256xf32>,
    return
  }
  func.func @transform_0(%arg0: i32) -> (i32, i32) {
    %c0_i32 = arith.constant 0 : i32
    %c0_i32_0 = arith.constant 0 : i32
    return %arg0, %c0_i32 : i32, i32
  }
  func.func @transform_1(%arg0: i32) -> (i32, i32) {
    %c0_i32 = arith.constant 0 : i32
    %c0_i32_0 = arith.constant 0 : i32
    %c0_i32_1 = arith.constant 0 : i32
    return %c0_i32, %c0_i32_0 : i32, i32
  }
  func.func @transform_2(%arg0: i32) -> (i32, i32) {
    %c0_i32 = arith.constant 0 : i32
    %c0_i32_0 = arith.constant 0 : i32
    %c0_i32_1 = arith.constant 0 : i32
    return %c0_i32, %c0_i32_0 : i32, i32
  }
  func.func @transform_3(%arg0: i32) -> (i32, i32) {
    %c0_i32 = arith.constant 0 : i32
    %c0_i32_0 = arith.constant 0 : i32
    %c0_i32_1 = arith.constant 0 : i32
    return %c0_i32, %c0_i32_0 : i32, i32
  }
  func.func @transform_4(%arg0: i32) -> (i32, i32) {
    %c0_i32 = arith.constant 0 : i32
    %c0_i32_0 = arith.constant 0 : i32
    %c0_i32_1 = arith.constant 0 : i32
    return %c0_i32, %c0_i32_0 : i32, i32
  }
  func.func @transform_5(%arg0: i32) -> (i32, i32) {
    %c0_i32 = arith.constant 0 : i32
    %c0_i32_0 = arith.constant 0 : i32
    return %arg0, %c0_i32 : i32, i32
  }
}

</mosaic_0001>

<llo_original>
// kernel: denoiser_forward.1
$region0: #{denoiser_forward.1}
  #allocation0 [shape = 'u32[]', space=smem, size = 0x4, offset = 0x4, fixed_abs, tag = 'smem constant byte address 0x4 - core index']
  #allocation1 [shape = 'u32[72,128]{1,0:T(1,128)}', space=vmem, size = 0x9000, scoped, tag = 'internal scratch']
  %s0 = inlined_call_operand.hbm [shape: f32[20,256], index: 0, kind: input, shape index: {}]
  %s1 = inlined_call_operand.hbm [shape: f32[256,128], index: 1, kind: input, shape index: {}]
  %s2 = inlined_call_operand.vmem [shape: f32[1,128], index: 2, kind: input, shape index: {}]
  %s3 = inlined_call_operand.hbm [shape: f32[128,256], index: 3, kind: input, shape index: {}]
  %s4 = inlined_call_operand.vmem [shape: f32[1,256], index: 4, kind: input, shape index: {}]
  %s5 = inlined_call_operand.hbm [shape: f32[20,256], index: 5, kind: output, shape index: {}]
  %s6 = sld [smem:[#allocation0]]
  $region65: #{denoiser_forward.1} parent=0
    _
  %s8 = ssub.s32 1, %s6
  %s9 = scalar_select 0, %s8, %s6
  $region1: #{denoiser_forward.1} parent=0
    #allocation2 [shape = 'u8[32768]{0}', space=vmem, size = 0x8000, scoped, tag = 'input window, operand 0']
    #allocation3 [shape = 's32[2]{0}', space=sflag, size = 0x8, scoped, tag = 'scoped memory for denoiser_forward.1']
    #allocation4 [shape = 's32[2]{0}', space=sflag, size = 0x8, scoped, tag = 'scoped memory for denoiser_forward.1']
    #allocation5 [shape = 'u8[131072]{0}', space=vmem, size = 0x20000, scoped, tag = 'input window, operand 1, single buffered']
    #allocation6 [shape = 's32[1]{0}', space=sflag, size = 0x4, scoped, tag = 'scoped memory for denoiser_forward.1']
    #allocation7 [shape = 'u8[131072]{0}', space=vmem, size = 0x20000, scoped, tag = 'input window, operand 3, single buffered']
    #allocation8 [shape = 'u8[32768]{0}', space=vmem, size = 0x8000, scoped, tag = 'output window, operand 0']
    %10 = vsyncpa [#allocation3], 0
    %s11 = scalar_lea.sflag [#allocation3], 1
    %12 = vsyncpa %s11, 0
    %13 = vsyncpa [#allocation6], 0
    %14 = vsyncpa [#allocation4], 0
    %s15 = scalar_lea.sflag [#allocation4], 1
    %16 = vsyncpa %s15, 0
    loop: start=0, step=1, limit=4
    $region2: #{denoiser_forward.1} parent=1 // loop_pre_header
      _
    $region3: #{denoiser_forward.1} parent=1 // loop_header
      %s18 = sphi 0, %s22
      %p19 = scmp.ge.s32.totalorder %s18, 4
      %s28 = sphi 0, %s30
      %s31 = sphi 0, %s28
      %s32 = sphi 0, %s31
      %s48 = sphi 0, %s32
      %s52 = sphi 0, %s52
      %s54 = sphi 0, %s52
      %s55 = sphi 0, %s54
      %s69 = sphi 0, %s55
      %s73 = sphi 0, %s73
      %s75 = sphi 0, %s73
      %s76 = sphi 0, %s75
      %s90 = sphi 0, %s76
      %s94 = sphi 0, %s94
      %s96 = sphi 0, %s94
      %s97 = sphi 0, %s96
      %s111 = sphi 0, %s97
      %s115 = sphi 0, %s115
      %s117 = sphi 0, %s115
      %s118 = sphi 0, %s117
      %s132 = sphi 0, %s118
      %s138 = sphi 0, %s140
      %s141 = sphi 0, %s138
      %s142 = sphi 0, %s141
      %s158 = sphi 0, %s142
    $region4: #{denoiser_forward.1} parent=1 // loop_header_branch
      %21 = sbr.rel (%p19) target = $region8
    $region5: #{denoiser_forward.1} parent=1 // loop_body
      %s23 = ssub.s32 %s18, 1
      %s24 = ssub.s32 %s18, 2
      %s25 = sadd.s32 %s18, 1
      %s26 = ssub.s32 %s18, %s25
      %p27 = scmp.eq.s32.totalorder %s26, 0
      %s29 = sadd.s32 %s28, 1
      %s30 = scalar_select %p27, %s28, %s29
      %p33 = pneg %p27
      %p34 = scmp.eq.s32.totalorder %s18, 1
      %p35 = por %p33, %p34
      %p36 = scmp.ne.s32.totalorder %s28, %s31
      %p37 = scmp.eq.s32.totalorder %s18, 0
      %p38 = por %p36, %p37
      %p39 = scmp.ne.s32.totalorder %s28, %s31
      %p40 = scmp.eq.s32.totalorder %s23, 1
      %p41 = por %p39, %p40
      %p42 = scmp.ne.s32.totalorder %s31, %s32
      %p43 = scmp.eq.s32.totalorder %s23, 0
      %p44 = por %p42, %p43
      %p45 = scmp.ne.s32.totalorder %s31, %s32
      %p46 = scmp.eq.s32.totalorder %s24, 1
      %p47 = por %p45, %p46
      %p49 = scmp.ne.s32.totalorder %s32, %s48
      %p50 = scmp.eq.s32.totalorder %s24, 0
      %p51 = por %p49, %p50
      %s53 = sadd.s32 %s52, 1
      %p56 = scmp.eq.s32.totalorder %s18, 1
      %p57 = scmp.ne.s32.totalorder %s52, %s54
      %p58 = scmp.eq.s32.totalorder %s18, 0
      %p59 = por %p57, %p58
      %p60 = scmp.ne.s32.totalorder %s52, %s54
      %p61 = scmp.eq.s32.totalorder %s23, 1
      %p62 = por %p60, %p61
      %p63 = scmp.ne.s32.totalorder %s54, %s55
      %p64 = scmp.eq.s32.totalorder %s23, 0
      %p65 = por %p63, %p64
      %p66 = scmp.ne.s32.totalorder %s54, %s55
      %p67 = scmp.eq.s32.totalorder %s24, 1
      %p68 = por %p66, %p67
      %p70 = scmp.ne.s32.totalorder %s55, %s69
      %p71 = scmp.eq.s32.totalorder %s24, 0
      %p72 = por %p70, %p71
      %s74 = sadd.s32 %s73, 1
      %p77 = scmp.eq.s32.totalorder %s18, 1
      %p78 = scmp.ne.s32.totalorder %s73, %s75
      %p79 = scmp.eq.s32.totalorder %s18, 0
      %p80 = por %p78, %p79
      %p81 = scmp.ne.s32.totalorder %s73, %s75
      %p82 = scmp.eq.s32.totalorder %s23, 1
      %p83 = por %p81, %p82
      %p84 = scmp.ne.s32.totalorder %s75, %s76
      %p85 = scmp.eq.s32.totalorder %s23, 0
      %p86 = por %p84, %p85
      %p87 = scmp.ne.s32.totalorder %s75, %s76
      %p88 = scmp.eq.s32.totalorder %s24, 1
      %p89 = por %p87, %p88
      %p91 = scmp.ne.s32.totalorder %s76, %s90
      %p92 = scmp.eq.s32.totalorder %s24, 0
      %p93 = por %p91, %p92
      %s95 = sadd.s32 %s94, 1
      %p98 = scmp.eq.s32.totalorder %s18, 1
      %p99 = scmp.ne.s32.totalorder %s94, %s96
      %p100 = scmp.eq.s32.totalorder %s18, 0
      %p101 = por %p99, %p100
      %p102 = scmp.ne.s32.totalorder %s94, %s96
      %p103 = scmp.eq.s32.totalorder %s23, 1
      %p104 = por %p102, %p103
      %p105 = scmp.ne.s32.totalorder %s96, %s97
      %p106 = scmp.eq.s32.totalorder %s23, 0
      %p107 = por %p105, %p106
      %p108 = scmp.ne.s32.totalorder %s96, %s97
      %p109 = scmp.eq.s32.totalorder %s24, 1
      %p110 = por %p108, %p109
      %p112 = scmp.ne.s32.totalorder %s97, %s111
      %p113 = scmp.eq.s32.totalorder %s24, 0
      %p114 = por %p112, %p113
      %s116 = sadd.s32 %s115, 1
      %p119 = scmp.eq.s32.totalorder %s18, 1
      %p120 = scmp.ne.s32.totalorder %s115, %s117
      %p121 = scmp.eq.s32.totalorder %s18, 0
      %p122 = por %p120, %p121
      %p123 = scmp.ne.s32.totalorder %s115, %s117
      %p124 = scmp.eq.s32.totalorder %s23, 1
      %p125 = por %p123, %p124
      %p126 = scmp.ne.s32.totalorder %s117, %s118
      %p127 = scmp.eq.s32.totalorder %s23, 0
      %p128 = por %p126, %p127
      %p129 = scmp.ne.s32.totalorder %s117, %s118
      %p130 = scmp.eq.s32.totalorder %s24, 1
      %p131 = por %p129, %p130
      %p133 = scmp.ne.s32.totalorder %s118, %s132
      %p134 = scmp.eq.s32.totalorder %s24, 0
      %p135 = por %p133, %p134
      %s136 = ssub.s32 %s18, %s25
      %p137 = scmp.eq.s32.totalorder %s136, 0
      %s139 = sadd.s32 %s138, 1
      %s140 = scalar_select %p137, %s138, %s139
      %p143 = pneg %p137
      %p144 = scmp.eq.s32.totalorder %s18, 1
      %p145 = por %p143, %p144
      %p146 = scmp.ne.s32.totalorder %s138, %s141
      %p147 = scmp.eq.s32.totalorder %s18, 0
      %p148 = por %p146, %p147
      %p149 = scmp.ne.s32.totalorder %s138, %s141
      %p150 = scmp.eq.s32.totalorder %s23, 1
      %p151 = por %p149, %p150
      %p152 = scmp.ne.s32.totalorder %s141, %s142
      %p153 = scmp.eq.s32.totalorder %s23, 0
      %p154 = por %p152, %p153
      %p155 = scmp.ne.s32.totalorder %s141, %s142
      %p156 = scmp.eq.s32.totalorder %s24, 1
      %p157 = por %p155, %p156
      %p159 = scmp.ne.s32.totalorder %s142, %s158
      %p160 = scmp.eq.s32.totalorder %s24, 0
      %p161 = por %p159, %p160
      %p162 = scmp.le.s32.totalorder 1, %s18
      %p163 = scmp.lt.s32.totalorder %s18, 3
      %p164 = pnand %p162, %p163
      %p165 = pneg %p164
      // Predicated region
      $region9: #{denoiser_forward.1} parent=5 // pred_check
        _
      $region10: #{denoiser_forward.1} parent=5 // pred_check_branch
        %167 = sbr.rel (%p164) target = $region12
      $region11: #{denoiser_forward.1} parent=5 // pred_region
        %s168 = ssub.s32 %s18, 1
        // Predicated region
        $region13: #{denoiser_forward.1} parent=11 // pred_check
          %p169 = pneg %p65
        $region14: #{denoiser_forward.1} parent=11 // pred_check_branch
          %171 = sbr.rel (%p169) target = $region16
        $region15: #{denoiser_forward.1} parent=11 // pred_region
          %173 = vsyncadd [#allocation6], 0
          %s174 = sshll.u32 %s1, 4
          %s175 = int_to_ptr.hbm [resolvable:$true] %s174
          %s176 = sshll.u32 [#allocation5], 4
          %s177 = int_to_ptr.vmem [resolvable:$true] %s176
          %182 = dma.hbm_to_vmem [thread:$0]  %s175, 4096, %s177, [#allocation6], 128, 128, 8
        $region16: #{denoiser_forward.1} parent=11 // pred_fallthru
          _
        // Predicated region
        $region17: #{denoiser_forward.1} parent=11 // pred_check
          %p183 = pneg %p86
        $region18: #{denoiser_forward.1} parent=11 // pred_check_branch
          %185 = sbr.rel (%p183) target = $region20
        $region19: #{denoiser_forward.1} parent=11 // pred_region
          _
        $region20: #{denoiser_forward.1} parent=11 // pred_fallthru
          _
        // Predicated region
        $region21: #{denoiser_forward.1} parent=11 // pred_check
          %p186 = pneg %p107
        $region22: #{denoiser_forward.1} parent=11 // pred_check_branch
          %188 = sbr.rel (%p186) target = $region24
        $region23: #{denoiser_forward.1} parent=11 // pred_region
          %190 = vsyncadd [#allocation6], 0
          %s191 = sshll.u32 %s3, 4
          %s192 = int_to_ptr.hbm [resolvable:$true] %s191
          %s193 = sshll.u32 [#allocation7], 4
          %s194 = int_to_ptr.vmem [resolvable:$true] %s193
          %199 = dma.hbm_to_vmem [thread:$0]  %s192, 4096, %s194, [#allocation6], 256, 256, 16
        $region24: #{denoiser_forward.1} parent=11 // pred_fallthru
          _
        // Predicated region
        $region25: #{denoiser_forward.1} parent=11 // pred_check
          %p200 = pneg %p128
        $region26: #{denoiser_forward.1} parent=11 // pred_check_branch
          %202 = sbr.rel (%p200) target = $region28
        $region27: #{denoiser_forward.1} parent=11 // pred_region
          _
        $region28: #{denoiser_forward.1} parent=11 // pred_fallthru
          _
      $region12: #{denoiser_forward.1} parent=5 // pred_fallthru
        _
      %p203 = scmp.lt.s32.totalorder %s18, 2
      // Predicated region
      $region29: #{denoiser_forward.1} parent=5 // pred_check
        %p204 = pneg %p203
      $region30: #{denoiser_forward.1} parent=5 // pred_check_branch
        %206 = sbr.rel (%p204) target = $region32
      $region31: #{denoiser_forward.1} parent=5 // pred_region
        // Predicated region
        $region33: #{denoiser_forward.1} parent=31 // pred_check
          %p207 = pneg %p38
        $region34: #{denoiser_forward.1} parent=31 // pred_check_branch
          %209 = sbr.rel (%p207) target = $region36
        $region35: #{denoiser_forward.1} parent=31 // pred_region
          %s210 = sand.u32 %s28, 1
          %s211 = scalar_lea.sflag [#allocation3], %s210
          %s212 = sand.u32 %s28, 1
          %s213 = smul.addr %s212, 32
          %s214 = scalar_lea.vmem [#allocation2], %s213
          %s215 = smul.u32 2, %s18
          %s216 = ssub.s32 3, %s215
          %p217 = scmp.lt.s32.totalorder %s216, 2
          %s218 = scalar_select %p217, %s216, 2
          %s219 = smul.u32 8, %s218
          %s220 = smul.u32 %s219, 2
          %s221 = ssub.s32 32, %s220
          %s222 = sshll.u32 %s221, 4
          %223 = vsyncadd %s211, %s222
          %p224 = scmp.ne.s32.totalorder 0, %s220
          %s225 = smul.addr %s215, 2
          %s226 = smul.addr %s225, 8
          %s227 = scalar_lea.hbm %s0, %s226
          %s228 = smul.u32 16, %s218
          %s229 = sshll.u32 %s227, 4
          %s230 = int_to_ptr.hbm [resolvable:$true] %s229
          %s231 = sshll.u32 %s214, 4
          %s232 = int_to_ptr.vmem [resolvable:$true] %s231
          %s233 = sshll.u32 %s228, 4
          %237 = dma.hbm_to_vmem [thread:$0]  (%p224), %s230, %s233, %s232, %s211, 256, 256, 16
        $region36: #{denoiser_forward.1} parent=31 // pred_fallthru
          _
      $region32: #{denoiser_forward.1} parent=5 // pred_fallthru
        _
      %p238 = scmp.le.s32.totalorder 1, %s18
      %p239 = scmp.lt.s32.totalorder %s18, 3
      %p240 = pnand %p238, %p239
      %p241 = pneg %p240
      // Predicated region
      $region37: #{denoiser_forward.1} parent=5 // pred_check
        _
      $region38: #{denoiser_forward.1} parent=5 // pred_check_branch
        %243 = sbr.rel (%p240) target = $region40
      $region39: #{denoiser_forward.1} parent=5 // pred_region
        %s244 = ssub.s32 %s18, 1
        %s245 = sand.u32 %s31, 1
        %s246 = scalar_lea.sflag [#allocation3], %s245
        %s247 = sand.u32 %s31, 1
        %s248 = smul.addr %s247, 32
        %s249 = scalar_lea.vmem [#allocation2], %s248
        // Predicated region
        $region41: #{denoiser_forward.1} parent=39 // pred_check
          %p250 = pneg %p44
        $region42: #{denoiser_forward.1} parent=39 // pred_check_branch
          %252 = sbr.rel (%p250) target = $region44
        $region43: #{denoiser_forward.1} parent=39 // pred_region
          %254 = dma.done %s246, 512
        $region44: #{denoiser_forward.1} parent=39 // pred_fallthru
          _
        // Predicated region
        $region45: #{denoiser_forward.1} parent=39 // pred_check
          %p255 = pneg %p65
        $region46: #{denoiser_forward.1} parent=39 // pred_check_branch
          %257 = sbr.rel (%p255) target = $region48
        $region47: #{denoiser_forward.1} parent=39 // pred_region
          %259 = dma.done [#allocation6], 4096
        $region48: #{denoiser_forward.1} parent=39 // pred_fallthru
          _
        // Predicated region
        $region49: #{denoiser_forward.1} parent=39 // pred_check
          %p260 = pneg %p107
        $region50: #{denoiser_forward.1} parent=39 // pred_check_branch
          %262 = sbr.rel (%p260) target = $region52
        $region51: #{denoiser_forward.1} parent=39 // pred_region
          %264 = dma.done [#allocation6], 4096
        $region52: #{denoiser_forward.1} parent=39 // pred_fallthru
          _
        %s265 = sand.u32 %s31, 1
        %s266 = scalar_lea.sflag [#allocation3], %s265
        %s267 = sand.u32 %s31, 1
        %s268 = smul.addr %s267, 32
        %s269 = scalar_lea.vmem [#allocation2], %s268
        %p270 = pneg %p44
        %p271 = pneg %p41
        %p272 = pneg %p65
        %p273 = pneg %p62
        %p274 = pneg %p86
        %p275 = pneg %p83
        %p276 = pneg %p107
        %p277 = pneg %p104
        %p278 = pneg %p128
        %p279 = pneg %p125
        %p280 = pneg %p154
        %p281 = pneg %p151
        %s282 = sand.u32 %s141, 1
        %s283 = scalar_lea.sflag [#allocation4], %s282
        %s284 = sand.u32 %s141, 1
        %s285 = smul.addr %s284, 32
        %s286 = scalar_lea.vmem [#allocation8], %s285
        %s287 = smul.u32 2, %s23
        %s288 = ssub.s32 3, %s287
        %p289 = scmp.lt.s32.totalorder %s288, 2
        %s290 = scalar_select %p289, %s288, 2
        %s291 = smul.u32 8, %s290
        %s292 = smul.u32 %s291, 2
        %s293 = smul.u32 2, %s23
        %s294 = ssub.s32 3, %s293
        %p295 = scmp.lt.s32.totalorder %s294, 2
        %s296 = scalar_select %p295, %s294, 2
        %s297 = smul.u32 8, %s296
        %s298 = smul.u32 %s297, 2
        %v299 = vld [vmem:[%s249] sm:$0xff]
        %v300 = vld [vmem:[%s249 + $0x8] sm:$0xff]
        %v301 = vld [vmem:[%s249 + $0x10] sm:$0xff]
        %v302 = vld [vmem:[%s249 + $0x18] sm:$0xff]
        %v303 = vld [vmem:[#allocation5] sm:$0xff]
        %v304 = vld [vmem:[#allocation5 + $0x8] sm:$0xff]
        %v305 = vld [vmem:[#allocation5 + $0x10] sm:$0xff]
        %v306 = vld [vmem:[#allocation5 + $0x18] sm:$0xff]
        %v307 = vld [vmem:[#allocation5 + $0x20] sm:$0xff]
        %v308 = vld [vmem:[#allocation5 + $0x28] sm:$0xff]
        %v309 = vld [vmem:[#allocation5 + $0x30] sm:$0xff]
        %v310 = vld [vmem:[#allocation5 + $0x38] sm:$0xff]
        %v311 = vld [vmem:[#allocation5 + $0x40] sm:$0xff]
        %v312 = vld [vmem:[#allocation5 + $0x48] sm:$0xff]
        %v313 = vld [vmem:[#allocation5 + $0x50] sm:$0xff]
        %v314 = vld [vmem:[#allocation5 + $0x58] sm:$0xff]
        %v315 = vld [vmem:[#allocation5 + $0x60] sm:$0xff]
        %v316 = vld [vmem:[#allocation5 + $0x68] sm:$0xff]
        %v317 = vld [vmem:[#allocation5 + $0x70] sm:$0xff]
        %v318 = vld [vmem:[#allocation5 + $0x78] sm:$0xff]
        %v319 = vld [vmem:[#allocation5 + $0x80] sm:$0xff]
        %v320 = vld [vmem:[#allocation5 + $0x88] sm:$0xff]
        %v321 = vld [vmem:[#allocation5 + $0x90] sm:$0xff]
        %v322 = vld [vmem:[#allocation5 + $0x98] sm:$0xff]
        %v323 = vld [vmem:[#allocation5 + $0xa0] sm:$0xff]
        %v324 = vld [vmem:[#allocation5 + $0xa8] sm:$0xff]
        %v325 = vld [vmem:[#allocation5 + $0xb0] sm:$0xff]
        %v326 = vld [vmem:[#allocation5 + $0xb8] sm:$0xff]
        %v327 = vld [vmem:[#allocation5 + $0xc0] sm:$0xff]
        %v328 = vld [vmem:[#allocation5 + $0xc8] sm:$0xff]
        %v329 = vld [vmem:[#allocation5 + $0xd0] sm:$0xff]
        %v330 = vld [vmem:[#allocation5 + $0xd8] sm:$0xff]
        %v331 = vld [vmem:[#allocation5 + $0xe0] sm:$0xff]
        %v332 = vld [vmem:[#allocation5 + $0xe8] sm:$0xff]
        %v333 = vld [vmem:[#allocation5 + $0xf0] sm:$0xff]
        %v334 = vld [vmem:[#allocation5 + $0xf8] sm:$0xff]
        %v335 = vld [vmem:[%s2] sm:$0x1]
        %v337 = vperm.slane %v335, 0
        %339 = vmatpush.msra.mxu0 %v318
        %340 = vmatpush.msra.mxu0 %v317
        %341 = vmatpush.msra.mxu0 %v316
        %342 = vmatpush.msra.mxu0 %v315
        %343 = vmatpush.msra.mxu0 %v314
        %344 = vmatpush.msra.mxu0 %v313
        %345 = vmatpush.msra.mxu0 %v312
        %346 = vmatpush.msra.mxu0 %v311
        %347 = vmatpush.msra.mxu0 %v310
        %348 = vmatpush.msra.mxu0 %v309
        %349 = vmatpush.msra.mxu0 %v308
        %350 = vmatpush.msra.mxu0 %v307
        %351 = vmatpush.msra.mxu0 %v306
        %352 = vmatpush.msra.mxu0 %v305
        %353 = vmatpush.msra.mxu0 %v304
        %354 = vmatpush.msra.mxu0 %v303
        %355 = vmatmul.f32.gmra.mxu0 %v299
        %v356 = vpop.f32.mrf.mxu0
        %v357 = vadd.f32 %v337, %v356
        %358 = vmatmul.f32.gmra.mxu0 %v301
        %v359 = vpop.f32.mrf.mxu0
        %v360 = vadd.f32 %v337, %v359
        %361 = vdwg.mxu0
        %362 = vmatpush.msra.mxu0 %v334
        %363 = vmatpush.msra.mxu0 %v333
        %364 = vmatpush.msra.mxu0 %v332
        %365 = vmatpush.msra.mxu0 %v331
        %366 = vmatpush.msra.mxu0 %v330
        %367 = vmatpush.msra.mxu0 %v329
        %368 = vmatpush.msra.mxu0 %v328
        %369 = vmatpush.msra.mxu0 %v327
        %370 = vmatpush.msra.mxu0 %v326
        %371 = vmatpush.msra.mxu0 %v325
        %372 = vmatpush.msra.mxu0 %v324
        %373 = vmatpush.msra.mxu0 %v323
        %374 = vmatpush.msra.mxu0 %v322
        %375 = vmatpush.msra.mxu0 %v321
        %376 = vmatpush.msra.mxu0 %v320
        %377 = vmatpush.msra.mxu0 %v319
        %378 = vmatmul.f32.gmra.mxu0 %v300
        %v379 = vpop.f32.mrf.mxu0
        %v380 = vadd.f32 %v357, %v379
        %381 = vmatmul.f32.gmra.mxu0 %v302
        %v382 = vpop.f32.mrf.mxu0
        %v383 = vadd.f32 %v360, %v382
        %384 = vdwg.mxu0
        %v385 = vmax.f32 %v380, 0.0
        %v386 = vmax.f32 %v383, 0.0
        %v387 = vld [vmem:[#allocation7] sm:$0xff]
        %v388 = vld [vmem:[#allocation7 + $0x8] sm:$0xff]
        %v389 = vld [vmem:[#allocation7 + $0x10] sm:$0xff]
        %v390 = vld [vmem:[#allocation7 + $0x18] sm:$0xff]
        %v391 = vld [vmem:[#allocation7 + $0x20] sm:$0xff]
        %v392 = vld [vmem:[#allocation7 + $0x28] sm:$0xff]
        %v393 = vld [vmem:[#allocation7 + $0x30] sm:$0xff]
        %v394 = vld [vmem:[#allocation7 + $0x38] sm:$0xff]
        %v395 = vld [vmem:[#allocation7 + $0x40] sm:$0xff]
        %v396 = vld [vmem:[#allocation7 + $0x48] sm:$0xff]
        %v397 = vld [vmem:[#allocation7 + $0x50] sm:$0xff]
        %v398 = vld [vmem:[#allocation7 + $0x58] sm:$0xff]
        %v399 = vld [vmem:[#allocation7 + $0x60] sm:$0xff]
        %v400 = vld [vmem:[#allocation7 + $0x68] sm:$0xff]
        %v401 = vld [vmem:[#allocation7 + $0x70] sm:$0xff]
        %v402 = vld [vmem:[#allocation7 + $0x78] sm:$0xff]
        %v403 = vld [vmem:[#allocation7 + $0x80] sm:$0xff]
        %v404 = vld [vmem:[#allocation7 + $0x88] sm:$0xff]
        %v405 = vld [vmem:[#allocation7 + $0x90] sm:$0xff]
        %v406 = vld [vmem:[#allocation7 + $0x98] sm:$0xff]
        %v407 = vld [vmem:[#allocation7 + $0xa0] sm:$0xff]
        %v408 = vld [vmem:[#allocation7 + $0xa8] sm:$0xff]
        %v409 = vld [vmem:[#allocation7 + $0xb0] sm:$0xff]
        %v410 = vld [vmem:[#allocation7 + $0xb8] sm:$0xff]
        %v411 = vld [vmem:[#allocation7 + $0xc0] sm:$0xff]
        %v412 = vld [vmem:[#allocation7 + $0xc8] sm:$0xff]
        %v413 = vld [vmem:[#allocation7 + $0xd0] sm:$0xff]
        %v414 = vld [vmem:[#allocation7 + $0xd8] sm:$0xff]
        %v415 = vld [vmem:[#allocation7 + $0xe0] sm:$0xff]
        %v416 = vld [vmem:[#allocation7 + $0xe8] sm:$0xff]
        %v417 = vld [vmem:[#allocation7 + $0xf0] sm:$0xff]
        %v418 = vld [vmem:[#allocation7 + $0xf8] sm:$0xff]
        %v419 = vld [vmem:[%s4] sm:$0x3]
        %v421 = vperm.slane %v419, 0
        %v422 = vperm.slane %v419, 1
        %425 = vmatpush.msra.mxu0 %v417
        %426 = vmatpush.msra.mxu0 %v415
        %427 = vmatpush.msra.mxu0 %v413
        %428 = vmatpush.msra.mxu0 %v411
        %429 = vmatpush.msra.mxu0 %v409
        %430 = vmatpush.msra.mxu0 %v407
        %431 = vmatpush.msra.mxu0 %v405
        %432 = vmatpush.msra.mxu0 %v403
        %433 = vmatpush.msra.mxu0 %v401
        %434 = vmatpush.msra.mxu0 %v399
        %435 = vmatpush.msra.mxu0 %v397
        %436 = vmatpush.msra.mxu0 %v395
        %437 = vmatpush.msra.mxu0 %v393
        %438 = vmatpush.msra.mxu0 %v391
        %439 = vmatpush.msra.mxu0 %v389
        %440 = vmatpush.msra.mxu0 %v387
        %441 = vmatmul.f32.gmra.mxu0 %v385
        %v442 = vpop.f32.mrf.mxu0
        %v443 = vadd.f32 %v421, %v442
        %444 = vmatmul.f32.gmra.mxu0 %v386
        %v445 = vpop.f32.mrf.mxu0
        %v446 = vadd.f32 %v421, %v445
        %447 = vdwg.mxu0
        %448 = vmatpush.msra.mxu0 %v418
        %449 = vmatpush.msra.mxu0 %v416
        %450 = vmatpush.msra.mxu0 %v414
        %451 = vmatpush.msra.mxu0 %v412
        %452 = vmatpush.msra.mxu0 %v410
        %453 = vmatpush.msra.mxu0 %v408
        %454 = vmatpush.msra.mxu0 %v406
        %455 = vmatpush.msra.mxu0 %v404
        %456 = vmatpush.msra.mxu0 %v402
        %457 = vmatpush.msra.mxu0 %v400
        %458 = vmatpush.msra.mxu0 %v398
        %459 = vmatpush.msra.mxu0 %v396
        %460 = vmatpush.msra.mxu0 %v394
        %461 = vmatpush.msra.mxu0 %v392
        %462 = vmatpush.msra.mxu0 %v390
        %463 = vmatpush.msra.mxu0 %v388
        %464 = vmatmul.f32.gmra.mxu0 %v385
        %v465 = vpop.f32.mrf.mxu0
        %v466 = vadd.f32 %v422, %v465
        %467 = vmatmul.f32.gmra.mxu0 %v386
        %v468 = vpop.f32.mrf.mxu0
        %v469 = vadd.f32 %v422, %v468
        %470 = vdwg.mxu0
        %v471 = vxor.u32 %v443, 2147483648
        %v472 = vxor.u32 %v466, 2147483648
        %v473 = vxor.u32 %v446, 2147483648
        %v474 = vxor.u32 %v469, 2147483648
        %v475 = vmul.f32 %v471, 1.442695
        %v476 = vpow.pop %v475
        %v477 = vmul.f32 %v472, 1.442695
        %v478 = vpow.pop %v477
        %v479 = vmul.f32 %v473, 1.442695
        %v480 = vpow.pop %v479
        %v481 = vmul.f32 %v474, 1.442695
        %v482 = vpow.pop %v481
        %v483 = vadd.f32 %v476, 1.0
        %v484 = vadd.f32 %v478, 1.0
        %v485 = vadd.f32 %v480, 1.0
        %v486 = vadd.f32 %v482, 1.0
        %v487 = vrcp.pop %v483
        %v488 = vmul.f32 %v483, %v487
        %v489 = vsub.f32 1.0, %v488
        %v490 = vmul.f32 %v487, %v489
        %v491 = vadd.f32 %v487, %v490
        %vm492 = vweird.f32 %v483
        %vm493 = vweird.f32 %v487
        %vm494 = vmor %vm492, %vm493
        %v495 = vsel %vm494, %v487, %v491
        %v496 = vand.u32 2147483647, %v483
        %vm497 = vcmp.eq.f32.partialorder %v496, 8.507059e+37
        %v498 = vand.u32 %v483, 2147483648
        %v499 = vor.u32 1.1754944e-38, %v498
        %v500 = vsel %vm497, %v499, %v495
        %v501 = vmul.f32 1.0, %v500
        %v502 = vrcp.pop %v484
        %v503 = vmul.f32 %v484, %v502
        %v504 = vsub.f32 1.0, %v503
        %v505 = vmul.f32 %v502, %v504
        %v506 = vadd.f32 %v502, %v505
        %vm507 = vweird.f32 %v484
        %vm508 = vweird.f32 %v502
        %vm509 = vmor %vm507, %vm508
        %v510 = vsel %vm509, %v502, %v506
        %v511 = vand.u32 2147483647, %v484
        %vm512 = vcmp.eq.f32.partialorder %v511, 8.507059e+37
        %v513 = vand.u32 %v484, 2147483648
        %v514 = vor.u32 1.1754944e-38, %v513
        %v515 = vsel %vm512, %v514, %v510
        %v516 = vmul.f32 1.0, %v515
        %v517 = vrcp.pop %v485
        %v518 = vmul.f32 %v485, %v517
        %v519 = vsub.f32 1.0, %v518
        %v520 = vmul.f32 %v517, %v519
        %v521 = vadd.f32 %v517, %v520
        %vm522 = vweird.f32 %v485
        %vm523 = vweird.f32 %v517
        %vm524 = vmor %vm522, %vm523
        %v525 = vsel %vm524, %v517, %v521
        %v526 = vand.u32 2147483647, %v485
        %vm527 = vcmp.eq.f32.partialorder %v526, 8.507059e+37
        %v528 = vand.u32 %v485, 2147483648
        %v529 = vor.u32 1.1754944e-38, %v528
        %v530 = vsel %vm527, %v529, %v525
        %v531 = vmul.f32 1.0, %v530
        %v532 = vrcp.pop %v486
        %v533 = vmul.f32 %v486, %v532
        %v534 = vsub.f32 1.0, %v533
        %v535 = vmul.f32 %v532, %v534
        %v536 = vadd.f32 %v532, %v535
        %vm537 = vweird.f32 %v486
        %vm538 = vweird.f32 %v532
        %vm539 = vmor %vm537, %vm538
        %v540 = vsel %vm539, %v532, %v536
        %v541 = vand.u32 2147483647, %v486
        %vm542 = vcmp.eq.f32.partialorder %v541, 8.507059e+37
        %v543 = vand.u32 %v486, 2147483648
        %v544 = vor.u32 1.1754944e-38, %v543
        %v545 = vsel %vm542, %v544, %v540
        %v546 = vmul.f32 1.0, %v545
        %547 = vst [vmem:[%s286] sm:$0xff] %v501
        %548 = vst [vmem:[%s286 + $0x8] sm:$0xff] %v516
        %549 = vst [vmem:[%s286 + $0x10] sm:$0xff] %v531
        %550 = vst [vmem:[%s286 + $0x18] sm:$0xff] %v546
        %s551 = sand.u32 %s141, 1
        %s552 = scalar_lea.sflag [#allocation4], %s551
        %s553 = sand.u32 %s141, 1
        %s554 = smul.addr %s553, 32
        %s555 = scalar_lea.vmem [#allocation8], %s554
        // Predicated region
        $region53: #{denoiser_forward.1} parent=39 // pred_check
          %p556 = pneg %p151
        $region54: #{denoiser_forward.1} parent=39 // pred_check_branch
          %558 = sbr.rel (%p556) target = $region56
        $region55: #{denoiser_forward.1} parent=39 // pred_region
          %s559 = smul.u32 2, %s23
          %s560 = ssub.s32 3, %s559
          %p561 = scmp.lt.s32.totalorder %s560, 2
          %s562 = scalar_select %p561, %s560, 2
          %s563 = smul.u32 8, %s562
          %s564 = smul.u32 %s563, 2
          %s565 = ssub.s32 32, %s564
          %s566 = sshll.u32 %s565, 4
          %567 = vsyncadd %s552, %s566
          %p568 = scmp.ne.s32.totalorder 0, %s564
          %s569 = smul.addr %s559, 2
          %s570 = smul.addr %s569, 8
          %s571 = scalar_lea.hbm %s5, %s570
          %s572 = smul.u32 16, %s562
          %s573 = sshll.u32 %s555, 4
          %s574 = int_to_ptr.vmem [resolvable:$true] %s573
          %s575 = sshll.u32 %s571, 4
          %s576 = int_to_ptr.hbm [resolvable:$true] %s575
          %s577 = sshll.u32 %s572, 4
          %581 = dma.vmem_to_hbm [thread:$0]  (%p568), %s574, %s577, %s576, %s552, 256, 256, 16
        $region56: #{denoiser_forward.1} parent=39 // pred_fallthru
          _
      $region40: #{denoiser_forward.1} parent=5 // pred_fallthru
        _
      %p582 = scmp.le.s32.totalorder 2, %s18
      // Predicated region
      $region57: #{denoiser_forward.1} parent=5 // pred_check
        %p583 = pneg %p582
      $region58: #{denoiser_forward.1} parent=5 // pred_check_branch
        %585 = sbr.rel (%p583) target = $region60
      $region59: #{denoiser_forward.1} parent=5 // pred_region
        %s586 = ssub.s32 %s18, 2
        // Predicated region
        $region61: #{denoiser_forward.1} parent=59 // pred_check
          %p587 = pneg %p157
        $region62: #{denoiser_forward.1} parent=59 // pred_check_branch
          %589 = sbr.rel (%p587) target = $region64
        $region63: #{denoiser_forward.1} parent=59 // pred_region
          %s590 = sand.u32 %s142, 1
          %s591 = scalar_lea.sflag [#allocation4], %s590
          %s592 = sand.u32 %s142, 1
          %s593 = smul.addr %s592, 32
          %s594 = scalar_lea.vmem [#allocation8], %s593
          %596 = dma.done %s591, 512
        $region64: #{denoiser_forward.1} parent=59 // pred_fallthru
          _
      $region60: #{denoiser_forward.1} parent=5 // pred_fallthru
        _
    $region6: #{denoiser_forward.1} parent=1 // loop_footer
      %s22 = sadd.s32 1, %s18
    $region7: #{denoiser_forward.1} parent=1 // loop_footer_branch
      %17 = sbr.rel target = $region3
    $region8: #{denoiser_forward.1} parent=1 // loop_exit
      _
    %597 = vsyncpa [#allocation3], 1
    %s598 = scalar_lea.sflag [#allocation3], 1
    %599 = vsyncpa %s598, 1
    %600 = vsyncpa [#allocation6], 1
    %601 = vsyncpa [#allocation4], 1
    %s602 = scalar_lea.sflag [#allocation4], 1
    %603 = vsyncpa %s602, 1

</llo_original>
